<compile_context>
chip_gen: v5e
topology: v5e:2x2
jax: 0.10.0
libtpu: 0.0.40
codegen_flags: <defaults>
</compile_context>

<pallas_src>
import functools

import jax
import jax.numpy as jnp
from jax.experimental import pallas as pl
from jax.experimental.pallas import tpu as pltpu


def ensemble_kernel(x_ref, w_ref, v_ref, o_ref,
                    acc_ref, bn1_ref, l2_ref, *, n_total, eps):
    """Fused feature-major forward.

    x_ref   : (16, Nt)  input tile, batch on the lane axis
    w_ref   : (20, 16)  packed weights: rows 0:16 = W1^T, 16:18 = W2^T,
                        18:20 (cols 0:2) = W3^T       (all (out, in))
    v_ref   : (16, 8)   packed column vectors:
                        col 0=b1, 1=gamma1, 2=beta1, 3=b2, 4=gamma2,
                        5=beta2, 6=b3 (2-wide params use rows 0:2)
    o_ref   : (2, Nt)   output tile
    acc_ref : (16, 2)   per-feature [sum, sumsq] accumulator (phases 0 and 1)
    bn1_ref : (16, 2)   BN1 [scale, shift]
    l2_ref  : (2, 17)   BN2 folded into l2: cols 0:16 = scale2*W2^T,
                        col 16 = scale2*b2 + shift2
    """
    phase = pl.program_id(0)
    t = pl.program_id(1)
    nt = pl.num_programs(1)
    inv_n = jnp.float32(1.0 / n_total)

    x = x_ref[...]                                                   # (16, Nt) f32

    # l1 + ReLU -- needed in every phase (recompute is cheaper than an HBM
    # round trip of the (16, N) intermediate).
    h1 = jnp.dot(w_ref[0:16, :], x, preferred_element_type=jnp.float32)
    h1 = jnp.maximum(h1 + v_ref[:, 0:1], 0.0)                        # (16, Nt)

    # ---------------- phase 0: BN1 full-batch statistics ----------------
    @pl.when(phase == 0)
    def _phase0():
        @pl.when(t == 0)
        def _():
            acc_ref[...] = jnp.zeros_like(acc_ref)

        acc_ref[:, 0:1] += jnp.sum(h1, axis=1, keepdims=True)
        acc_ref[:, 1:2] += jnp.sum(h1 * h1, axis=1, keepdims=True)

        @pl.when(t == nt - 1)
        def _():
            mu = acc_ref[:, 0:1] * inv_n
            var = acc_ref[:, 1:2] * inv_n - mu * mu                  # biased var
            scale = v_ref[:, 1:2] * jax.lax.rsqrt(var + eps)         # g1*rsqrt
            bn1_ref[:, 0:1] = scale
            bn1_ref[:, 1:2] = v_ref[:, 2:3] - mu * scale             # be1 - mu*scale

    # ---------------- phase 1: BN2 full-batch statistics ----------------
    @pl.when(phase == 1)
    def _phase1():
        @pl.when(t == 0)
        def _():
            acc_ref[...] = jnp.zeros_like(acc_ref)

        a = jnp.maximum(bn1_ref[:, 0:1] * h1 + bn1_ref[:, 1:2], 0.0)  # (16, Nt)
        h2 = jnp.dot(w_ref[16:18, :], a, preferred_element_type=jnp.float32)
        h2 = h2 + v_ref[0:2, 3:4]                                     # (2, Nt)

        acc_ref[0:2, 0:1] += jnp.sum(h2, axis=1, keepdims=True)
        acc_ref[0:2, 1:2] += jnp.sum(h2 * h2, axis=1, keepdims=True)

        @pl.when(t == nt - 1)
        def _():
            mu = acc_ref[0:2, 0:1] * inv_n
            var = acc_ref[0:2, 1:2] * inv_n - mu * mu
            scale = v_ref[0:2, 4:5] * jax.lax.rsqrt(var + eps)        # g2*rsqrt
            shift = v_ref[0:2, 5:6] - mu * scale                      # be2 - mu*scale
            # Fold BN2 into l2:  BN2(W2^T a + b2) == (scale*W2^T) a + (scale*b2 + shift)
            l2_ref[:, 0:16] = scale * w_ref[16:18, :]
            l2_ref[:, 16:17] = scale * v_ref[0:2, 3:4] + shift

    # ---------------- phase 2: apply and write the output ----------------
    @pl.when(phase == 2)
    def _phase2():
        a = jnp.maximum(bn1_ref[:, 0:1] * h1 + bn1_ref[:, 1:2], 0.0)  # (16, Nt)
        h2n = jnp.dot(l2_ref[:, 0:16], a, preferred_element_type=jnp.float32)
        h2n = h2n + l2_ref[:, 16:17]                                  # = BN2(l2(a)), (2, Nt)
        out = jnp.dot(w_ref[18:20, 0:2], h2n, preferred_element_type=jnp.float32)
        out = out + v_ref[0:2, 6:7]                                   # l3
        o_ref[...] = out.astype(o_ref.dtype)


def ensemble_forward(x, w_slab, v_slab, *, tile_n=512):
    """x: (N, 16) float32 -> (N, 2) float32 (training-mode BatchNorm semantics)."""
    n = x.shape[0]
    assert x.shape[1] == 16
    if n % tile_n != 0 or tile_n % 128 != 0:
        tile_n = n                      # single-tile fallback for small/ragged batches
    num_tiles = n // tile_n

    x_fm = x.T.astype(jnp.float32)      # (16, N): batch on the lane axis

    kernel = functools.partial(ensemble_kernel, n_total=float(n), eps=1e-5)

    out_fm = pl.pallas_call(
        kernel,
        out_shape=jax.ShapeDtypeStruct((2, n), jnp.float32),
        grid=(3, num_tiles),            # (phase, batch tile)
        in_specs=[
            pl.BlockSpec((16, tile_n), lambda p, t: (0, t)),   # x tile (pipelined)
            pl.BlockSpec((20, 16), lambda p, t: (0, 0)),       # weight slab (resident)
            pl.BlockSpec((16, 8), lambda p, t: (0, 0)),        # bias/BN slab (resident)
        ],
        out_specs=pl.BlockSpec((2, tile_n), lambda p, t: (0, t)),
        scratch_shapes=[
            pltpu.VMEM((16, 2), jnp.float32),   # sum / sumsq accumulator
            pltpu.VMEM((16, 2), jnp.float32),   # BN1 scale / shift
            pltpu.VMEM((2, 17), jnp.float32),   # BN2 folded into l2 (W2eff | b2eff)
        ],
        compiler_params=pltpu.CompilerParams(
            # Both axes carry VMEM-scratch state (running batch statistics), so
            # they must stay sequential; a "parallel" batch axis would give
            # each core its own partial sums and break the BN statistics.
            dimension_semantics=("arbitrary", "arbitrary"),
            vmem_limit_bytes=32 * 1024 * 1024,   # safe on v5e/v6e/v7x
        ),
    )(x_fm, w_slab, v_slab)

    return out_fm.T                     # back to (N, 2)


def init_params(key):
    """Deterministic synthetic parameters with PyTorch-like Linear init ranges."""
    ks = jax.random.split(key, 6)

    def linear(kw, kb, fan_in, fan_out):
        bound = 1.0 / jnp.sqrt(jnp.float32(fan_in))
        w = jax.random.uniform(kw, (fan_in, fan_out), jnp.float32, -bound, bound)
        b = jax.random.uniform(kb, (fan_out,), jnp.float32, -bound, bound)
        return w, b

    w1, b1 = linear(ks[0], ks[1], 16, 16)
    w2, b2 = linear(ks[2], ks[3], 16, 2)
    w3, b3 = linear(ks[4], ks[5], 2, 2)
    return {
        "w1": w1, "b1": b1, "w2": w2, "b2": b2, "w3": w3, "b3": b3,
        # BatchNorm affine params: gamma=1, beta=0 (PyTorch default init)
        "g1": jnp.ones((16,), jnp.float32), "be1": jnp.zeros((16,), jnp.float32),
        "g2": jnp.ones((2,), jnp.float32), "be2": jnp.zeros((2,), jnp.float32),
    }


def pack_params(p):
    """Pack all 10 parameter tensors into two small slabs (2 DMAs instead of 11)."""
    w_slab = jnp.zeros((20, 16), jnp.float32)
    w_slab = w_slab.at[0:16, :].set(p["w1"].T)       # W1^T (out, in)
    w_slab = w_slab.at[16:18, :].set(p["w2"].T)      # W2^T
    w_slab = w_slab.at[18:20, 0:2].set(p["w3"].T)    # W3^T

    v_slab = jnp.zeros((16, 8), jnp.float32)
    v_slab = v_slab.at[:, 0].set(p["b1"])
    v_slab = v_slab.at[:, 1].set(p["g1"])
    v_slab = v_slab.at[:, 2].set(p["be1"])
    v_slab = v_slab.at[0:2, 3].set(p["b2"])
    v_slab = v_slab.at[0:2, 4].set(p["g2"])
    v_slab = v_slab.at[0:2, 5].set(p["be2"])
    v_slab = v_slab.at[0:2, 6].set(p["b3"])
    return w_slab, v_slab


def reference_forward(x, p):
    """Plain-JAX reference of the PyTorch forward (training-mode BN)."""
    eps = 1e-5
    h = x @ p["w1"] + p["b1"]
    h = jnp.maximum(h, 0.0)
    mu = jnp.mean(h, axis=0)
    var = jnp.mean((h - mu) ** 2, axis=0)
    h = (h - mu) / jnp.sqrt(var + eps) * p["g1"] + p["be1"]
    h = jnp.maximum(h, 0.0)
    h = h @ p["w2"] + p["b2"]
    mu = jnp.mean(h, axis=0)
    var = jnp.mean((h - mu) ** 2, axis=0)
    h = (h - mu) / jnp.sqrt(var + eps) * p["g2"] + p["be2"]
    h = h @ p["w3"] + p["b3"]
    return h


if __name__ == "__main__":
    key = jax.random.PRNGKey(0)
    kx, kxs, kp = jax.random.split(key, 3)

    params = init_params(kp)
    w_slab, v_slab = pack_params(params)

    # Multi-tile case: exercises the 3-phase grid with 2 batch tiles of 128.
    x = jax.random.normal(kx, (256, 16), jnp.float32)
    out = jax.block_until_ready(ensemble_forward(x, w_slab, v_slab, tile_n=128))
    ref = reference_forward(x, params)
    assert out.shape == (256, 2)
    assert jnp.allclose(out, ref, atol=1e-4, rtol=1e-4), float(jnp.max(jnp.abs(out - ref)))

    # Tiny batch: single-tile fallback path.
    x_small = jax.random.normal(kxs, (8, 16), jnp.float32)
    out_s = jax.block_until_ready(ensemble_forward(x_small, w_slab, v_slab))
    ref_s = reference_forward(x_small, params)
    assert out_s.shape == (8, 2)
    assert jnp.allclose(out_s, ref_s, atol=1e-4, rtol=1e-4), float(jnp.max(jnp.abs(out_s - ref_s)))

    print("KERNEL_OK")
</pallas_src>

<mosaic_0001>
module attributes {stable_mosaic.version = 11 : i64} {
  func.func @ensemble_kernel(%arg0: i32, %arg1: i32, %arg2: memref<16x128xf32, #tpu.memory_space<vmem>>, %arg3: memref<20x16xf32, #tpu.memory_space<vmem>>, %arg4: memref<16x8xf32, #tpu.memory_space<vmem>>, %arg5: memref<2x128xf32, #tpu.memory_space<vmem>>, %arg6: memref<16x2xf32, #tpu.memory_space<vmem>>, %arg7: memref<16x2xf32, #tpu.memory_space<vmem>>, %arg8: memref<2x17xf32, #tpu.memory_space<vmem>>) attributes {dimension_semantics = [#tpu.dimension_semantics<arbitrary>, #tpu.dimension_semantics<arbitrary>], iteration_bounds = array<i64: 3, 2>, scalar_prefetch = 0 : i64, scratch_operands = 3 : i64, tpu.core_type = #tpu.core_type<tc>, window_params = [{transform_indices = @transform_0, window_bounds = array<i64: 16, 128>}, {pipeline_mode = #tpu.pipeline_mode<synchronous>, transform_indices = @transform_1, window_bounds = array<i64: 20, 16>}, {pipeline_mode = #tpu.pipeline_mode<synchronous>, transform_indices = @transform_2, window_bounds = array<i64: 16, 8>}, {transform_indices = @transform_3, window_bounds = array<i64: 2, 128>}]} {
    %c0 = arith.constant 0 : index
    %c0_0 = arith.constant 0 : index
    %0 = vector.load %arg2[%c0, %c0_0] : memref<16x128xf32, #tpu.memory_space<vmem>>, vector<16x128xf32>
    %c0_1 = arith.constant 0 : index
    %c0_2 = arith.constant 0 : index
    %1 = vector.load %arg3[%c0_1, %c0_2] : memref<20x16xf32, #tpu.memory_space<vmem>>, vector<16x16xf32>
    %cst = arith.constant dense<0.000000e+00> : vector<16x128xf32>
    %2 = tpu.matmul %1, %0, %cst {dimension_numbers = #tpu.dot_dimension_numbers<[1], [0], [0], [1], [0, 0, 1, 1], [], []>} : vector<16x16xf32>, vector<16x128xf32>, vector<16x128xf32> -> vector<16x128xf32>
    %c0_3 = arith.constant 0 : index
    %c0_4 = arith.constant 0 : index
    %3 = vector.load %arg4[%c0_3, %c0_4] : memref<16x8xf32, #tpu.memory_space<vmem>>, vector<16x1xf32>
    %4 = vector.broadcast %3 : vector<16x1xf32> to vector<16x128xf32>
    %5 = arith.addf %2, %4 : vector<16x128xf32>
    %cst_5 = arith.constant 0.000000e+00 : f32
    %6 = vector.broadcast %cst_5 : f32 to vector<16x128xf32>
    %7 = arith.maximumf %5, %6 : vector<16x128xf32>
    %c0_i32 = arith.constant 0 : i32
    %8 = arith.cmpi eq, %arg0, %c0_i32 : i32
    %9 = arith.extui %8 : i1 to i32
    %cst_6 = arith.constant 3.906250e-03 : f32
    %c0_i32_7 = arith.constant 0 : i32
    %10 = arith.cmpi ne, %9, %c0_i32_7 : i32
    scf.if %10 {
      %c0_i32_11 = arith.constant 0 : i32
      %17 = arith.cmpi eq, %arg1, %c0_i32_11 : i32
      %18 = arith.extui %17 : i1 to i32
      %c0_i32_12 = arith.constant 0 : i32
      %19 = arith.cmpi ne, %18, %c0_i32_12 : i32
      scf.if %19 {
        %cst_24 = arith.constant 0.000000e+00 : f32
        %34 = vector.broadcast %cst_24 : f32 to vector<16x2xf32>
        %c0_25 = arith.constant 0 : index
        %c0_26 = arith.constant 0 : index
        %35 = vector.load %arg6[%c0_25, %c0_26] : memref<16x2xf32, #tpu.memory_space<vmem>>, vector<16x2xf32>
        tpu.vector_store %arg6[%c0_25, %c0_26], %34 {strides = array<i32>} : memref<16x2xf32, #tpu.memory_space<vmem>>, vector<16x2xf32>,
      } else {
      }
      %c0_13 = arith.constant 0 : index
      %c0_14 = arith.constant 0 : index
      %20 = vector.load %arg6[%c0_13, %c0_14] : memref<16x2xf32, #tpu.memory_space<vmem>>, vector<16x1xf32>
      %cst_15 = arith.constant dense<0.000000e+00> : vector<16xf32>
      %21 = vector.multi_reduction <add>, %7, %cst_15 [1] : vector<16x128xf32> to vector<16xf32>
      %22 = vector.shape_cast %21 : vector<16xf32> to vector<16x1xf32>
      %23 = arith.addf %20, %22 : vector<16x1xf32>
      %c0_16 = arith.constant 0 : index
      %c0_17 = arith.constant 0 : index
      %24 = vector.load %arg6[%c0_16, %c0_17] : memref<16x2xf32, #tpu.memory_space<vmem>>, vector<16x1xf32>
      tpu.vector_store %arg6[%c0_16, %c0_17], %23 {strides = array<i32>} : memref<16x2xf32, #tpu.memory_space<vmem>>, vector<16x1xf32>,
      %c0_18 = arith.constant 0 : index
      %c1 = arith.constant 1 : index
      %25 = vector.load %arg6[%c0_18, %c1] : memref<16x2xf32, #tpu.memory_space<vmem>>, vector<16x1xf32>
      %26 = arith.mulf %7, %7 : vector<16x128xf32>
      %cst_19 = arith.constant dense<0.000000e+00> : vector<16xf32>
      %27 = vector.multi_reduction <add>, %26, %cst_19 [1] : vector<16x128xf32> to vector<16xf32>
      %28 = vector.shape_cast %27 : vector<16xf32> to vector<16x1xf32>
      %29 = arith.addf %25, %28 : vector<16x1xf32>
      %c0_20 = arith.constant 0 : index
      %c1_21 = arith.constant 1 : index
      %30 = vector.load %arg6[%c0_20, %c1_21] : memref<16x2xf32, #tpu.memory_space<vmem>>, vector<16x1xf32>
      tpu.vector_store %arg6[%c0_20, %c1_21], %29 {strides = array<i32>} : memref<16x2xf32, #tpu.memory_space<vmem>>, vector<16x1xf32>,
      %c1_i32_22 = arith.constant 1 : i32
      %31 = arith.cmpi eq, %arg1, %c1_i32_22 : i32
      %32 = arith.extui %31 : i1 to i32
      %c0_i32_23 = arith.constant 0 : i32
      %33 = arith.cmpi ne, %32, %c0_i32_23 : i32
      scf.if %33 {
        %c0_24 = arith.constant 0 : index
        %c0_25 = arith.constant 0 : index
        %34 = vector.load %arg6[%c0_24, %c0_25] : memref<16x2xf32, #tpu.memory_space<vmem>>, vector<16x1xf32>
        %35 = vector.broadcast %cst_6 : f32 to vector<16x1xf32>
        %36 = arith.mulf %34, %35 : vector<16x1xf32>
        %c0_26 = arith.constant 0 : index
        %c1_27 = arith.constant 1 : index
        %37 = vector.load %arg6[%c0_26, %c1_27] : memref<16x2xf32, #tpu.memory_space<vmem>>, vector<16x1xf32>
        %38 = vector.broadcast %cst_6 : f32 to vector<16x1xf32>
        %39 = arith.mulf %37, %38 : vector<16x1xf32>
        %40 = arith.mulf %36, %36 : vector<16x1xf32>
        %41 = arith.subf %39, %40 : vector<16x1xf32>
        %c0_28 = arith.constant 0 : index
        %c1_29 = arith.constant 1 : index
        %42 = vector.load %arg4[%c0_28, %c1_29] : memref<16x8xf32, #tpu.memory_space<vmem>>, vector<16x1xf32>
        %cst_30 = arith.constant 9.99999974E-6 : f32
        %43 = vector.broadcast %cst_30 : f32 to vector<16x1xf32>
        %44 = arith.addf %41, %43 : vector<16x1xf32>
        %45 = math.rsqrt %44 : vector<16x1xf32>
        %46 = arith.mulf %42, %45 : vector<16x1xf32>
        %c0_31 = arith.constant 0 : index
        %c0_32 = arith.constant 0 : index
        %47 = vector.load %arg7[%c0_31, %c0_32] : memref<16x2xf32, #tpu.memory_space<vmem>>, vector<16x1xf32>
        tpu.vector_store %arg7[%c0_31, %c0_32], %46 {strides = array<i32>} : memref<16x2xf32, #tpu.memory_space<vmem>>, vector<16x1xf32>,
        %c0_33 = arith.constant 0 : index
        %c2 = arith.constant 2 : index
        %48 = vector.load %arg4[%c0_33, %c2] : memref<16x8xf32, #tpu.memory_space<vmem>>, vector<16x1xf32>
        %49 = arith.mulf %36, %46 : vector<16x1xf32>
        %50 = arith.subf %48, %49 : vector<16x1xf32>
        %c0_34 = arith.constant 0 : index
        %c1_35 = arith.constant 1 : index
        %51 = vector.load %arg7[%c0_34, %c1_35] : memref<16x2xf32, #tpu.memory_space<vmem>>, vector<16x1xf32>
        tpu.vector_store %arg7[%c0_34, %c1_35], %50 {strides = array<i32>} : memref<16x2xf32, #tpu.memory_space<vmem>>, vector<16x1xf32>,
      } else {
      }
    } else {
    }
    %c1_i32 = arith.constant 1 : i32
    %11 = arith.cmpi eq, %arg0, %c1_i32 : i32
    %12 = arith.extui %11 : i1 to i32
    %cst_8 = arith.constant 3.906250e-03 : f32
    %c0_i32_9 = arith.constant 0 : i32
    %13 = arith.cmpi ne, %12, %c0_i32_9 : i32
    scf.if %13 {
      %c0_i32_11 = arith.constant 0 : i32
      %17 = arith.cmpi eq, %arg1, %c0_i32_11 : i32
      %18 = arith.extui %17 : i1 to i32
      %c0_i32_12 = arith.constant 0 : i32
      %19 = arith.cmpi ne, %18, %c0_i32_12 : i32
      scf.if %19 {
        %cst_32 = arith.constant 0.000000e+00 : f32
        %47 = vector.broadcast %cst_32 : f32 to vector<16x2xf32>
        %c0_33 = arith.constant 0 : index
        %c0_34 = arith.constant 0 : index
        %48 = vector.load %arg6[%c0_33, %c0_34] : memref<16x2xf32, #tpu.memory_space<vmem>>, vector<16x2xf32>
        tpu.vector_store %arg6[%c0_33, %c0_34], %47 {strides = array<i32>} : memref<16x2xf32, #tpu.memory_space<vmem>>, vector<16x2xf32>,
      } else {
      }
      %c0_13 = arith.constant 0 : index
      %c0_14 = arith.constant 0 : index
      %20 = vector.load %arg7[%c0_13, %c0_14] : memref<16x2xf32, #tpu.memory_space<vmem>>, vector<16x1xf32>
      %21 = vector.broadcast %20 : vector<16x1xf32> to vector<16x128xf32>
      %22 = arith.mulf %21, %7 : vector<16x128xf32>
      %c0_15 = arith.constant 0 : index
      %c1 = arith.constant 1 : index
      %23 = vector.load %arg7[%c0_15, %c1] : memref<16x2xf32, #tpu.memory_space<vmem>>, vector<16x1xf32>
      %24 = vector.broadcast %23 : vector<16x1xf32> to vector<16x128xf32>
      %25 = arith.addf %22, %24 : vector<16x128xf32>
      %cst_16 = arith.constant 0.000000e+00 : f32
      %26 = vector.broadcast %cst_16 : f32 to vector<16x128xf32>
      %27 = arith.maximumf %25, %26 : vector<16x128xf32>
      %c16 = arith.constant 16 : index
      %c0_17 = arith.constant 0 : index
      %28 = vector.load %arg3[%c16, %c0_17] : memref<20x16xf32, #tpu.memory_space<vmem>>, vector<2x16xf32>
      %cst_18 = arith.constant dense<0.000000e+00> : vector<2x128xf32>
      %29 = tpu.matmul %28, %27, %cst_18 {dimension_numbers = #tpu.dot_dimension_numbers<[1], [0], [0], [1], [0, 0, 1, 1], [], []>} : vector<2x16xf32>, vector<16x128xf32>, vector<2x128xf32> -> vector<2x128xf32>
      %c0_19 = arith.constant 0 : index
      %c3 = arith.constant 3 : index
      %30 = vector.load %arg4[%c0_19, %c3] : memref<16x8xf32, #tpu.memory_space<vmem>>, vector<2x1xf32>
      %31 = vector.broadcast %30 : vector<2x1xf32> to vector<2x128xf32>
      %32 = arith.addf %29, %31 : vector<2x128xf32>
      %c0_20 = arith.constant 0 : index
      %c0_21 = arith.constant 0 : index
      %33 = vector.load %arg6[%c0_20, %c0_21] : memref<16x2xf32, #tpu.memory_space<vmem>>, vector<2x1xf32>
      %cst_22 = arith.constant dense<0.000000e+00> : vector<2xf32>
      %34 = vector.multi_reduction <add>, %32, %cst_22 [1] : vector<2x128xf32> to vector<2xf32>
      %35 = vector.shape_cast %34 : vector<2xf32> to vector<2x1xf32>
      %36 = arith.addf %33, %35 : vector<2x1xf32>
      %c0_23 = arith.constant 0 : index
      %c0_24 = arith.constant 0 : index
      %37 = vector.load %arg6[%c0_23, %c0_24] : memref<16x2xf32, #tpu.memory_space<vmem>>, vector<2x1xf32>
      tpu.vector_store %arg6[%c0_23, %c0_24], %36 {strides = array<i32>} : memref<16x2xf32, #tpu.memory_space<vmem>>, vector<2x1xf32>,
      %c0_25 = arith.constant 0 : index
      %c1_26 = arith.constant 1 : index
      %38 = vector.load %arg6[%c0_25, %c1_26] : memref<16x2xf32, #tpu.memory_space<vmem>>, vector<2x1xf32>
      %39 = arith.mulf %32, %32 : vector<2x128xf32>
      %cst_27 = arith.constant dense<0.000000e+00> : vector<2xf32>
      %40 = vector.multi_reduction <add>, %39, %cst_27 [1] : vector<2x128xf32> to vector<2xf32>
      %41 = vector.shape_cast %40 : vector<2xf32> to vector<2x1xf32>
      %42 = arith.addf %38, %41 : vector<2x1xf32>
      %c0_28 = arith.constant 0 : index
      %c1_29 = arith.constant 1 : index
      %43 = vector.load %arg6[%c0_28, %c1_29] : memref<16x2xf32, #tpu.memory_space<vmem>>, vector<2x1xf32>
      tpu.vector_store %arg6[%c0_28, %c1_29], %42 {strides = array<i32>} : memref<16x2xf32, #tpu.memory_space<vmem>>, vector<2x1xf32>,
      %c1_i32_30 = arith.constant 1 : i32
      %44 = arith.cmpi eq, %arg1, %c1_i32_30 : i32
      %45 = arith.extui %44 : i1 to i32
      %c0_i32_31 = arith.constant 0 : i32
      %46 = arith.cmpi ne, %45, %c0_i32_31 : i32
      scf.if %46 {
        %c0_32 = arith.constant 0 : index
        %c0_33 = arith.constant 0 : index
        %47 = vector.load %arg6[%c0_32, %c0_33] : memref<16x2xf32, #tpu.memory_space<vmem>>, vector<2x1xf32>
        %48 = vector.broadcast %cst_8 : f32 to vector<2x1xf32>
        %49 = arith.mulf %47, %48 : vector<2x1xf32>
        %c0_34 = arith.constant 0 : index
        %c1_35 = arith.constant 1 : index
        %50 = vector.load %arg6[%c0_34, %c1_35] : memref<16x2xf32, #tpu.memory_space<vmem>>, vector<2x1xf32>
        %51 = vector.broadcast %cst_8 : f32 to vector<2x1xf32>
        %52 = arith.mulf %50, %51 : vector<2x1xf32>
        %53 = arith.mulf %49, %49 : vector<2x1xf32>
        %54 = arith.subf %52, %53 : vector<2x1xf32>
        %c0_36 = arith.constant 0 : index
        %c4 = arith.constant 4 : index
        %55 = vector.load %arg4[%c0_36, %c4] : memref<16x8xf32, #tpu.memory_space<vmem>>, vector<2x1xf32>
        %cst_37 = arith.constant 9.99999974E-6 : f32
        %56 = vector.broadcast %cst_37 : f32 to vector<2x1xf32>
        %57 = arith.addf %54, %56 : vector<2x1xf32>
        %58 = math.rsqrt %57 : vector<2x1xf32>
        %59 = arith.mulf %55, %58 : vector<2x1xf32>
        %c0_38 = arith.constant 0 : index
        %c5 = arith.constant 5 : index
        %60 = vector.load %arg4[%c0_38, %c5] : memref<16x8xf32, #tpu.memory_space<vmem>>, vector<2x1xf32>
        %61 = arith.mulf %49, %59 : vector<2x1xf32>
        %62 = arith.subf %60, %61 : vector<2x1xf32>
        %c16_39 = arith.constant 16 : index
        %c0_40 = arith.constant 0 : index
        %63 = vector.load %arg3[%c16_39, %c0_40] : memref<20x16xf32, #tpu.memory_space<vmem>>, vector<2x16xf32>
        %64 = vector.broadcast %59 : vector<2x1xf32> to vector<2x16xf32>
        %65 = arith.mulf %64, %63 : vector<2x16xf32>
        %c0_41 = arith.constant 0 : index
        %c0_42 = arith.constant 0 : index
        %66 = vector.load %arg8[%c0_41, %c0_42] : memref<2x17xf32, #tpu.memory_space<vmem>>, vector<2x16xf32>
        tpu.vector_store %arg8[%c0_41, %c0_42], %65 {strides = array<i32>} : memref<2x17xf32, #tpu.memory_space<vmem>>, vector<2x16xf32>,
        %c0_43 = arith.constant 0 : index
        %c3_44 = arith.constant 3 : index
        %67 = vector.load %arg4[%c0_43, %c3_44] : memref<16x8xf32, #tpu.memory_space<vmem>>, vector<2x1xf32>
        %68 = arith.mulf %59, %67 : vector<2x1xf32>
        %69 = arith.addf %68, %62 : vector<2x1xf32>
        %c0_45 = arith.constant 0 : index
        %c16_46 = arith.constant 16 : index
        %70 = vector.load %arg8[%c0_45, %c16_46] : memref<2x17xf32, #tpu.memory_space<vmem>>, vector<2x1xf32>
        tpu.vector_store %arg8[%c0_45, %c16_46], %69 {strides = array<i32>} : memref<2x17xf32, #tpu.memory_space<vmem>>, vector<2x1xf32>,
      } else {
      }
    } else {
    }
    %c2_i32 = arith.constant 2 : i32
    %14 = arith.cmpi eq, %arg0, %c2_i32 : i32
    %15 = arith.extui %14 : i1 to i32
    %c0_i32_10 = arith.constant 0 : i32
    %16 = arith.cmpi ne, %15, %c0_i32_10 : i32
    scf.if %16 {
      %c0_11 = arith.constant 0 : index
      %c0_12 = arith.constant 0 : index
      %17 = vector.load %arg7[%c0_11, %c0_12] : memref<16x2xf32, #tpu.memory_space<vmem>>, vector<16x1xf32>
      %18 = vector.broadcast %17 : vector<16x1xf32> to vector<16x128xf32>
      %19 = arith.mulf %18, %7 : vector<16x128xf32>
      %c0_13 = arith.constant 0 : index
      %c1 = arith.constant 1 : index
      %20 = vector.load %arg7[%c0_13, %c1] : memref<16x2xf32, #tpu.memory_space<vmem>>, vector<16x1xf32>
      %21 = vector.broadcast %20 : vector<16x1xf32> to vector<16x128xf32>
      %22 = arith.addf %19, %21 : vector<16x128xf32>
      %cst_14 = arith.constant 0.000000e+00 : f32
      %23 = vector.broadcast %cst_14 : f32 to vector<16x128xf32>
      %24 = arith.maximumf %22, %23 : vector<16x128xf32>
      %c0_15 = arith.constant 0 : index
      %c0_16 = arith.constant 0 : index
      %25 = vector.load %arg8[%c0_15, %c0_16] : memref<2x17xf32, #tpu.memory_space<vmem>>, vector<2x16xf32>
      %cst_17 = arith.constant dense<0.000000e+00> : vector<2x128xf32>
      %26 = tpu.matmul %25, %24, %cst_17 {dimension_numbers = #tpu.dot_dimension_numbers<[1], [0], [0], [1], [0, 0, 1, 1], [], []>} : vector<2x16xf32>, vector<16x128xf32>, vector<2x128xf32> -> vector<2x128xf32>
      %c0_18 = arith.constant 0 : index
      %c16 = arith.constant 16 : index
      %27 = vector.load %arg8[%c0_18, %c16] : memref<2x17xf32, #tpu.memory_space<vmem>>, vector<2x1xf32>
      %28 = vector.broadcast %27 : vector<2x1xf32> to vector<2x128xf32>
      %29 = arith.addf %26, %28 : vector<2x128xf32>
      %c18 = arith.constant 18 : index
      %c0_19 = arith.constant 0 : index
      %30 = vector.load %arg3[%c18, %c0_19] : memref<20x16xf32, #tpu.memory_space<vmem>>, vector<2x2xf32>
      %cst_20 = arith.constant dense<0.000000e+00> : vector<2x128xf32>
      %31 = tpu.matmul %30, %29, %cst_20 {dimension_numbers = #tpu.dot_dimension_numbers<[1], [0], [0], [1], [0, 0, 1, 1], [], []>} : vector<2x2xf32>, vector<2x128xf32>, vector<2x128xf32> -> vector<2x128xf32>
      %c0_21 = arith.constant 0 : index
      %c6 = arith.constant 6 : index
      %32 = vector.load %arg4[%c0_21, %c6] : memref<16x8xf32, #tpu.memory_space<vmem>>, vector<2x1xf32>
      %33 = vector.broadcast %32 : vector<2x1xf32> to vector<2x128xf32>
      %34 = arith.addf %31, %33 : vector<2x128xf32>
      %c0_22 = arith.constant 0 : index
      %c0_23 = arith.constant 0 : index
      %35 = vector.load %arg5[%c0_22, %c0_23] : memref<2x128xf32, #tpu.memory_space<vmem>>, vector<2x128xf32>
      tpu.vector_store %arg5[%c0_22, %c0_23], %34 {strides = array<i32>} : memref<2x128xf32, #tpu.memory_space<vmem>>, vector<2x128xf32>,
    } else {
    }
    return
  }
  func.func @transform_0(%arg0: i32, %arg1: i32) -> (i32, i32) {
    %c0_i32 = arith.constant 0 : i32
    %c0_i32_0 = arith.constant 0 : i32
    return %c0_i32, %arg1 : i32, i32
  }
  func.func @transform_1(%arg0: i32, %arg1: i32) -> (i32, i32) {
    %c0_i32 = arith.constant 0 : i32
    %c0_i32_0 = arith.constant 0 : i32
    %c0_i32_1 = arith.constant 0 : i32
    return %c0_i32, %c0_i32_0 : i32, i32
  }
  func.func @transform_2(%arg0: i32, %arg1: i32) -> (i32, i32) {
    %c0_i32 = arith.constant 0 : i32
    %c0_i32_0 = arith.constant 0 : i32
    %c0_i32_1 = arith.constant 0 : i32
    return %c0_i32, %c0_i32_0 : i32, i32
  }
  func.func @transform_3(%arg0: i32, %arg1: i32) -> (i32, i32) {
    %c0_i32 = arith.constant 0 : i32
    %c0_i32_0 = arith.constant 0 : i32
    return %c0_i32, %arg1 : i32, i32
  }
}

</mosaic_0001>

<llo_original>
// kernel: tpu_custom_call.1
$region0: #{tpu_custom_call.1}
  #allocation0 [shape = 'u32[]', space=smem, size = 0x4, offset = 0x4, fixed_abs, tag = 'smem constant byte address 0x4 - core index']
  #allocation1 [shape = 'u32[72,128]{1,0:T(1,128)}', space=vmem, size = 0x9000, scoped, tag = 'internal scratch']
  #allocation2 [shape = 'f32[16,2]{1,0:T(8,128)}', space=vmem, size = 0x2000, scoped, tag = 'scratch operand']
  #allocation3 [shape = 'f32[16,2]{1,0:T(8,128)}', space=vmem, size = 0x2000, scoped, tag = 'scratch operand']
  #allocation4 [shape = 'f32[2,17]{1,0:T(2,128)}', space=vmem, size = 0x400, scoped, tag = 'scratch operand']
  %s0 = inlined_call_operand.vmem [shape: f32[16,256], index: 0, kind: input, shape index: {}]
  %s1 = inlined_call_operand.vmem [shape: f32[20,16], index: 1, kind: input, shape index: {}]
  %s2 = inlined_call_operand.vmem [shape: f32[16,8], index: 2, kind: input, shape index: {}]
  %s3 = inlined_call_operand.hbm [shape: f32[2,256], index: 3, kind: output, shape index: {}]
  %s4 = sld [smem:[#allocation0]]
  $region111: #{tpu_custom_call.1} parent=0
    _
  %s6 = ssub.s32 1, %s4
  %s7 = scalar_select 0, %s6, %s4
  $region1: #{tpu_custom_call.1} parent=0
    #allocation5 [shape = 'u8[16384]{0}', space=vmem, size = 0x4000, scoped, tag = 'input window, operand 0']
    #allocation6 [shape = 'u8[2048]{0}', space=vmem, size = 0x800, scoped, tag = 'output window, operand 0']
    #allocation7 [shape = 's32[2]{0}', space=sflag, size = 0x8, scoped, tag = 'scoped memory for tpu_custom_call.1']
    %8 = vsyncpa [#allocation7], 0
    %s9 = scalar_lea.sflag [#allocation7], 1
    %10 = vsyncpa %s9, 0
    loop: start=0, step=1, limit=8
    $region2: #{tpu_custom_call.1} parent=1 // loop_pre_header
      _
    $region3: #{tpu_custom_call.1} parent=1 // loop_header
      %s12 = sphi 0, %s16
      %p13 = scmp.ge.s32.totalorder %s12, 8
      %s19 = sphi 0, %s31
      %s20 = sphi 0, %s27
      %s21 = sphi 0, %s19
      %s22 = sphi 0, %s20
      %s23 = sphi 0, %s21
      %s24 = sphi 0, %s22
      %s34 = sphi 0, %s36
      %s37 = sphi 0, %s34
      %s38 = sphi 0, %s37
      %s54 = sphi 0, %s38
      %s58 = sphi 0, %s58
      %s60 = sphi 0, %s58
      %s61 = sphi 0, %s60
      %s75 = sphi 0, %s61
      %s79 = sphi 0, %s79
      %s81 = sphi 0, %s79
      %s82 = sphi 0, %s81
      %s96 = sphi 0, %s82
      %s102 = sphi 0, %s104
      %s105 = sphi 0, %s102
      %s106 = sphi 0, %s105
      %s122 = sphi 0, %s106
    $region4: #{tpu_custom_call.1} parent=1 // loop_header_branch
      %15 = sbr.rel (%p13) target = $region8
    $region5: #{tpu_custom_call.1} parent=1 // loop_body
      %s17 = ssub.s32 %s12, 1
      %s18 = ssub.s32 %s12, 2
      %s25 = sadd.s32 1, %s20
      %p26 = scmp.ge.s32.totalorder %s25, 2
      %s27 = scalar_select %p26, 0, %s25
      %s28 = sadd.s32 1, %s19
      %s29 = scalar_select %p26, %s28, %s19
      %p30 = scmp.ge.s32.totalorder %s29, 3
      %s31 = scalar_select %p30, 0, %s29
      %s32 = ssub.s32 %s20, %s27
      %p33 = scmp.eq.s32.totalorder %s32, 0
      %s35 = sadd.s32 %s34, 1
      %s36 = scalar_select %p33, %s34, %s35
      %p39 = pneg %p33
      %p40 = scmp.eq.s32.totalorder %s12, 5
      %p41 = por %p39, %p40
      %p42 = scmp.ne.s32.totalorder %s34, %s37
      %p43 = scmp.eq.s32.totalorder %s12, 0
      %p44 = por %p42, %p43
      %p45 = scmp.ne.s32.totalorder %s34, %s37
      %p46 = scmp.eq.s32.totalorder %s17, 5
      %p47 = por %p45, %p46
      %p48 = scmp.ne.s32.totalorder %s37, %s38
      %p49 = scmp.eq.s32.totalorder %s17, 0
      %p50 = por %p48, %p49
      %p51 = scmp.ne.s32.totalorder %s37, %s38
      %p52 = scmp.eq.s32.totalorder %s18, 5
      %p53 = por %p51, %p52
      %p55 = scmp.ne.s32.totalorder %s38, %s54
      %p56 = scmp.eq.s32.totalorder %s18, 0
      %p57 = por %p55, %p56
      %s59 = sadd.s32 %s58, 1
      %p62 = scmp.eq.s32.totalorder %s12, 5
      %p63 = scmp.ne.s32.totalorder %s58, %s60
      %p64 = scmp.eq.s32.totalorder %s12, 0
      %p65 = por %p63, %p64
      %p66 = scmp.ne.s32.totalorder %s58, %s60
      %p67 = scmp.eq.s32.totalorder %s17, 5
      %p68 = por %p66, %p67
      %p69 = scmp.ne.s32.totalorder %s60, %s61
      %p70 = scmp.eq.s32.totalorder %s17, 0
      %p71 = por %p69, %p70
      %p72 = scmp.ne.s32.totalorder %s60, %s61
      %p73 = scmp.eq.s32.totalorder %s18, 5
      %p74 = por %p72, %p73
      %p76 = scmp.ne.s32.totalorder %s61, %s75
      %p77 = scmp.eq.s32.totalorder %s18, 0
      %p78 = por %p76, %p77
      %s80 = sadd.s32 %s79, 1
      %p83 = scmp.eq.s32.totalorder %s12, 5
      %p84 = scmp.ne.s32.totalorder %s79, %s81
      %p85 = scmp.eq.s32.totalorder %s12, 0
      %p86 = por %p84, %p85
      %p87 = scmp.ne.s32.totalorder %s79, %s81
      %p88 = scmp.eq.s32.totalorder %s17, 5
      %p89 = por %p87, %p88
      %p90 = scmp.ne.s32.totalorder %s81, %s82
      %p91 = scmp.eq.s32.totalorder %s17, 0
      %p92 = por %p90, %p91
      %p93 = scmp.ne.s32.totalorder %s81, %s82
      %p94 = scmp.eq.s32.totalorder %s18, 5
      %p95 = por %p93, %p94
      %p97 = scmp.ne.s32.totalorder %s82, %s96
      %p98 = scmp.eq.s32.totalorder %s18, 0
      %p99 = por %p97, %p98
      %s100 = ssub.s32 %s20, %s27
      %p101 = scmp.eq.s32.totalorder %s100, 0
      %s103 = sadd.s32 %s102, 1
      %s104 = scalar_select %p101, %s102, %s103
      %p107 = pneg %p101
      %p108 = scmp.eq.s32.totalorder %s12, 5
      %p109 = por %p107, %p108
      %p110 = scmp.ne.s32.totalorder %s102, %s105
      %p111 = scmp.eq.s32.totalorder %s12, 0
      %p112 = por %p110, %p111
      %p113 = scmp.ne.s32.totalorder %s102, %s105
      %p114 = scmp.eq.s32.totalorder %s17, 5
      %p115 = por %p113, %p114
      %p116 = scmp.ne.s32.totalorder %s105, %s106
      %p117 = scmp.eq.s32.totalorder %s17, 0
      %p118 = por %p116, %p117
      %p119 = scmp.ne.s32.totalorder %s105, %s106
      %p120 = scmp.eq.s32.totalorder %s18, 5
      %p121 = por %p119, %p120
      %p123 = scmp.ne.s32.totalorder %s106, %s122
      %p124 = scmp.eq.s32.totalorder %s18, 0
      %p125 = por %p123, %p124
      %p126 = scmp.le.s32.totalorder 1, %s12
      %p127 = scmp.lt.s32.totalorder %s12, 7
      %p128 = pnand %p126, %p127
      %p129 = pneg %p128
      // Predicated region
      $region9: #{tpu_custom_call.1} parent=5 // pred_check
        _
      $region10: #{tpu_custom_call.1} parent=5 // pred_check_branch
        %131 = sbr.rel (%p128) target = $region12
      $region11: #{tpu_custom_call.1} parent=5 // pred_region
        %s132 = ssub.s32 %s12, 1
        // Predicated region
        $region13: #{tpu_custom_call.1} parent=11 // pred_check
          %p133 = pneg %p71
        $region14: #{tpu_custom_call.1} parent=11 // pred_check_branch
          %135 = sbr.rel (%p133) target = $region16
        $region15: #{tpu_custom_call.1} parent=11 // pred_region
          _
        $region16: #{tpu_custom_call.1} parent=11 // pred_fallthru
          _
        // Predicated region
        $region17: #{tpu_custom_call.1} parent=11 // pred_check
          %p136 = pneg %p92
        $region18: #{tpu_custom_call.1} parent=11 // pred_check_branch
          %138 = sbr.rel (%p136) target = $region20
        $region19: #{tpu_custom_call.1} parent=11 // pred_region
          _
        $region20: #{tpu_custom_call.1} parent=11 // pred_fallthru
          _
      $region12: #{tpu_custom_call.1} parent=5 // pred_fallthru
        _
      %p139 = scmp.lt.s32.totalorder %s12, 6
      // Predicated region
      $region21: #{tpu_custom_call.1} parent=5 // pred_check
        %p140 = pneg %p139
      $region22: #{tpu_custom_call.1} parent=5 // pred_check_branch
        %142 = sbr.rel (%p140) target = $region24
      $region23: #{tpu_custom_call.1} parent=5 // pred_region
        // Predicated region
        $region25: #{tpu_custom_call.1} parent=23 // pred_check
          %p143 = pneg %p44
        $region26: #{tpu_custom_call.1} parent=23 // pred_check_branch
          %145 = sbr.rel (%p143) target = $region28
        $region27: #{tpu_custom_call.1} parent=23 // pred_region
          %s146 = sand.u32 %s34, 1
          %s147 = sand.u32 %s34, 1
          %s148 = smul.addr %s147, 16
          %s149 = scalar_lea.vmem [#allocation5], %s148
          %s150 = smul.addr %s20, 8
          %s151 = scalar_lea.vmem %s0, %s150
          // Predicated region
          $region29: #{tpu_custom_call.1} parent=27 // pred_check
            _
          $region30: #{tpu_custom_call.1} parent=27 // pred_check_branch
            %153 = sbr.rel (0) target = $region32
          $region31: #{tpu_custom_call.1} parent=27 // pred_region
            // Predicated region
            $region33: #{tpu_custom_call.1} parent=31 // pred_check
              _
            $region34: #{tpu_custom_call.1} parent=31 // pred_check_branch
              %155 = sbr.rel (0) target = $region36
            $region35: #{tpu_custom_call.1} parent=31 // pred_region
              // Predicated region
              $region48: #{tpu_custom_call.1} parent=35 // pred_check
                _
              $region49: #{tpu_custom_call.1} parent=35 // pred_check_branch
                %173 = sbr.rel (0) target = $region51
              $region50: #{tpu_custom_call.1} parent=35 // pred_region
                loop: start=0, step=1, limit=1
                $region52: #{tpu_custom_call.1} parent=50 // loop_pre_header
                  _
                $region53: #{tpu_custom_call.1} parent=50 // loop_header
                  %s175 = sphi 0, %s179
                  %p176 = scmp.ge.s32.totalorder %s175, 1
                  %s180 = sphi %s151, %s151
                  %s181 = sphi %s149, %s149
                $region54: #{tpu_custom_call.1} parent=50 // loop_header_branch
                  %178 = sbr.rel (%p176) target = $region58
                $region55: #{tpu_custom_call.1} parent=50 // loop_body
                  %v182 = vld [vmem:[%s180] sm:$0xff]
                  %183 = vst [vmem:[%s181] sm:$0xff] %v182
                  %v184 = vld [vmem:[%s180 + $0x10] sm:$0xff]
                  %185 = vst [vmem:[%s181 + $0x8] sm:$0xff] %v184
                $region56: #{tpu_custom_call.1} parent=50 // loop_footer
                  %s179 = sadd.s32 1, %s175
                $region57: #{tpu_custom_call.1} parent=50 // loop_footer_branch
                  %174 = sbr.rel target = $region53
                $region58: #{tpu_custom_call.1} parent=50 // loop_exit
                  _
              $region51: #{tpu_custom_call.1} parent=35 // pred_fallthru
                _
              // Predicated region
              $region59: #{tpu_custom_call.1} parent=35 // pred_check
                _
              $region60: #{tpu_custom_call.1} parent=35 // pred_check_branch
                %187 = sbr.rel target = $region62
              $region61: #{tpu_custom_call.1} parent=35 // pred_region
                _
              $region62: #{tpu_custom_call.1} parent=35 // pred_fallthru
                _
            $region36: #{tpu_custom_call.1} parent=31 // pred_fallthru
              _
            // Predicated region
            $region37: #{tpu_custom_call.1} parent=31 // pred_check
              _
            $region38: #{tpu_custom_call.1} parent=31 // pred_check_branch
              %157 = sbr.rel target = $region40
            $region39: #{tpu_custom_call.1} parent=31 // pred_region
              %s159 = ssub.s32 256, 1
              loop: start=0, step=1, limit=1
              $region41: #{tpu_custom_call.1} parent=39 // loop_pre_header
                _
              $region42: #{tpu_custom_call.1} parent=39 // loop_header
                %s161 = sphi 0, %s165
                %p162 = scmp.ge.s32.totalorder %s161, 1
                %s166 = sphi %s151, %s151
                %s167 = sphi %s149, %s149
              $region43: #{tpu_custom_call.1} parent=39 // loop_header_branch
                %164 = sbr.rel (%p162) target = $region47
              $region44: #{tpu_custom_call.1} parent=39 // loop_body
                %v168 = vld [vmem:[%s166] sm:%s159]
                %169 = vst [vmem:[%s167] sm:%s159] %v168
                %v170 = vld [vmem:[%s166 + $0x10] sm:%s159]
                %171 = vst [vmem:[%s167 + $0x8] sm:%s159] %v170
              $region45: #{tpu_custom_call.1} parent=39 // loop_footer
                %s165 = sadd.s32 1, %s161
              $region46: #{tpu_custom_call.1} parent=39 // loop_footer_branch
                %160 = sbr.rel target = $region42
              $region47: #{tpu_custom_call.1} parent=39 // loop_exit
                _
            $region40: #{tpu_custom_call.1} parent=31 // pred_fallthru
              _
          $region32: #{tpu_custom_call.1} parent=27 // pred_fallthru
            _
          %188 = vnop
        $region28: #{tpu_custom_call.1} parent=23 // pred_fallthru
          _
      $region24: #{tpu_custom_call.1} parent=5 // pred_fallthru
        _
      %p189 = scmp.le.s32.totalorder 1, %s12
      %p190 = scmp.lt.s32.totalorder %s12, 7
      %p191 = pnand %p189, %p190
      %p192 = pneg %p191
      // Predicated region
      $region63: #{tpu_custom_call.1} parent=5 // pred_check
        _
      $region64: #{tpu_custom_call.1} parent=5 // pred_check_branch
        %194 = sbr.rel (%p191) target = $region66
      $region65: #{tpu_custom_call.1} parent=5 // pred_region
        %s195 = ssub.s32 %s12, 1
        %s196 = sand.u32 %s37, 1
        %s197 = sand.u32 %s37, 1
        %s198 = smul.addr %s197, 16
        %s199 = scalar_lea.vmem [#allocation5], %s198
        // Predicated region
        $region67: #{tpu_custom_call.1} parent=65 // pred_check
          %p200 = pneg %p50
        $region68: #{tpu_custom_call.1} parent=65 // pred_check_branch
          %202 = sbr.rel (%p200) target = $region70
        $region69: #{tpu_custom_call.1} parent=65 // pred_region
          _
        $region70: #{tpu_custom_call.1} parent=65 // pred_fallthru
          _
        %s203 = sand.u32 %s37, 1
        %s204 = sand.u32 %s37, 1
        %s205 = smul.addr %s204, 16
        %s206 = scalar_lea.vmem [#allocation5], %s205
        %p207 = pneg %p50
        %p208 = pneg %p47
        %p209 = pneg %p71
        %p210 = pneg %p68
        %p211 = pneg %p92
        %p212 = pneg %p89
        %p213 = pneg %p118
        %p214 = pneg %p115
        %s215 = sand.u32 %s105, 1
        %s216 = scalar_lea.sflag [#allocation7], %s215
        %s217 = sand.u32 %s105, 1
        %s218 = smul.addr %s217, 2
        %s219 = scalar_lea.vmem [#allocation6], %s218
        %v220 = vld [vmem:[%s199] sm:$0xff]
        %v221 = vld [vmem:[%s199 + $0x8] sm:$0xff]
        %v222 = vld [vmem:[%s1] sm:$0xff]
        %v223 = vld [vmem:[%s1 + $0x8] sm:$0xff]
        %v224 = vld [vmem:[%s2] sm:$0xff]
        %v225 = vld [vmem:[%s2 + $0x8] sm:$0xff]
        %227 = vset.pattern.permute.xlu0 0
        %228 = vperm.xlu0 %227, %v224
        %v229 = vpop.permute.xlu0 %228
        %232 = vset.pattern.permute.xlu0 0
        %233 = vperm.xlu0 %232, %v225
        %v234 = vpop.permute.xlu0 %233
        %vm236 = vcmask 130048
        %v238 = vsel %vm236, %v222, 0
        %v241 = vsel %vm236, %v223, 0
        %243 = vmatpush.msra.mxu0 0.0
        %244 = vmatpush.msra.mxu0 0.0
        %245 = vmatpush.msra.mxu0 0.0
        %246 = vmatpush.msra.mxu0 0.0
        %247 = vmatpush.msra.mxu0 0.0
        %248 = vmatpush.msra.mxu0 0.0
        %249 = vmatpush.msra.mxu0 0.0
        %250 = vmatpush.msra.mxu0 0.0
        %251 = vmatpush.msra.mxu0 0.0
        %252 = vmatpush.msra.mxu0 0.0
        %253 = vmatpush.msra.mxu0 0.0
        %254 = vmatpush.msra.mxu0 0.0
        %255 = vmatpush.msra.mxu0 0.0
        %256 = vmatpush.msra.mxu0 0.0
        %257 = vmatpush.msra.mxu0 %v221
        %258 = vmatpush.msra.mxu0 %v220
        %259 = vmatmul.f32.gmra.mxu0 %v238
        %v260 = vpop.f32.mrf.mxu0
        %v261 = vadd.f32 %v229, %v260
        %262 = vmatmul.f32.gmra.mxu0 %v241
        %v263 = vpop.f32.mrf.mxu0
        %v264 = vadd.f32 %v234, %v263
        %265 = vdwg.mxu0
        %v266 = vmax.f32 %v261, 0.0
        %v267 = vmax.f32 %v264, 0.0
        %p268 = scmp.eq.s32.totalorder %s21, 0
        // Predicated region
        $region71: #{tpu_custom_call.1} parent=65 // pred_check
          %p269 = pneg %p268
        $region72: #{tpu_custom_call.1} parent=65 // pred_check_branch
          %271 = sbr.rel (%p269) target = $region74
        $region73: #{tpu_custom_call.1} parent=65 // pred_region
          %p272 = scmp.eq.s32.totalorder %s22, 0
          // Predicated region
          $region75: #{tpu_custom_call.1} parent=73 // pred_check
            %p273 = pneg %p272
          $region76: #{tpu_custom_call.1} parent=73 // pred_check_branch
            %275 = sbr.rel (%p273) target = $region78
          $region77: #{tpu_custom_call.1} parent=73 // pred_region
            %vm276 = vcmask 15360
            %277 = vst.msk [vmem:[#allocation2] sm:$0xff] %vm276, 0.0
            %278 = vst.msk [vmem:[#allocation2 + $0x8] sm:$0xff] %vm276, 0.0
          $region78: #{tpu_custom_call.1} parent=73 // pred_fallthru
            _
          %v279 = vld [vmem:[#allocation2] sm:$0xff]
          %v280 = vld [vmem:[#allocation2 + $0x8] sm:$0xff]
          %281 = vadd.xlane.f32.xlu0 %v266
          %v282 = vpop.xlane.xlu0 %281
          %283 = vadd.xlane.f32.xlu0 %v267
          %v284 = vpop.xlane.xlu0 %283
          %v285 = vadd.f32 %v279, %v282
          %v286 = vadd.f32 %v280, %v284
          %vm287 = vcmask 7168
          %288 = vst.msk [vmem:[#allocation2] sm:$0xff] %vm287, %v285
          %289 = vst.msk [vmem:[#allocation2 + $0x8] sm:$0xff] %vm287, %v286
          %v290 = vld [vmem:[#allocation2] sm:$0xff]
          %v291 = vld [vmem:[#allocation2 + $0x8] sm:$0xff]
          %v292 = vmul.f32 %v266, %v266
          %v293 = vmul.f32 %v267, %v267
          %294 = vadd.xlane.f32.xlu0 %v292
          %v295 = vpop.xlane.xlu0 %294
          %296 = vadd.xlane.f32.xlu0 %v293
          %v297 = vpop.xlane.xlu0 %296
          %v298 = vadd.f32 %v290, %v295
          %v299 = vadd.f32 %v291, %v297
          %vm300 = vcmask 15368
          %301 = vst.msk [vmem:[#allocation2] sm:$0xff] %vm300, %v298
          %302 = vst.msk [vmem:[#allocation2 + $0x8] sm:$0xff] %vm300, %v299
          %p303 = scmp.eq.s32.totalorder %s22, 1
          // Predicated region
          $region79: #{tpu_custom_call.1} parent=73 // pred_check
            %p304 = pneg %p303
          $region80: #{tpu_custom_call.1} parent=73 // pred_check_branch
            %306 = sbr.rel (%p304) target = $region82
          $region81: #{tpu_custom_call.1} parent=73 // pred_region
            %v307 = vld [vmem:[#allocation2] sm:$0xff]
            %v308 = vld [vmem:[#allocation2 + $0x8] sm:$0xff]
            %v309 = vmul.f32 %v307, 0.00390625
            %v310 = vmul.f32 %v308, 0.00390625
            %v311 = vmul.f32 %v309, %v309
            %v312 = vmul.f32 %v310, %v310
            %315 = vrot.lane.b32.xlu0 %v311, 1
            %v316 = vpop.permute.xlu0 %315
            %317 = vrot.lane.b32.xlu0 %v312, 1
            %v318 = vpop.permute.xlu0 %317
            %v321 = vsub.f32 %v309, %v316
            %v322 = vsub.f32 %v310, %v318
            %v323 = vld [vmem:[%s2] sm:$0xff]
            %v324 = vld [vmem:[%s2 + $0x8] sm:$0xff]
            %v325 = vadd.f32 %v321, 1e-05
            %v326 = vadd.f32 %v322, 1e-05
            %v327 = vrsqrt.pop %v325
            %v328 = vmul.f32 %v327, %v325
            %v329 = vmul.f32 %v328, %v327
            %v330 = vmul.f32 0.5, %v329
            %v331 = vsub.f32 1.5, %v330
            %v332 = vmul.f32 %v327, %v331
            %vm333 = vweird.f32 %v325
            %vm334 = vweird.f32 %v327
            %vm335 = vmor %vm333, %vm334
            %v336 = vsel %vm335, %v327, %v332
            %v337 = vrsqrt.pop %v326
            %v338 = vmul.f32 %v337, %v326
            %v339 = vmul.f32 %v338, %v337
            %v340 = vmul.f32 0.5, %v339
            %v341 = vsub.f32 1.5, %v340
            %v342 = vmul.f32 %v337, %v341
            %vm343 = vweird.f32 %v326
            %vm344 = vweird.f32 %v337
            %vm345 = vmor %vm343, %vm344
            %v346 = vsel %vm345, %v337, %v342
            %v347 = vmul.f32 %v323, %v336
            %v348 = vmul.f32 %v324, %v346
            %351 = vrot.lane.b32.xlu0 %v347, 127
            %v352 = vpop.permute.xlu0 %351
            %353 = vrot.lane.b32.xlu0 %v348, 127
            %v354 = vpop.permute.xlu0 %353
            %357 = vst.msk [vmem:[#allocation3] sm:$0xff] %vm287, %v352
            %358 = vst.msk [vmem:[#allocation3 + $0x8] sm:$0xff] %vm287, %v354
            %v359 = vld [vmem:[%s2] sm:$0xff]
            %v360 = vld [vmem:[%s2 + $0x8] sm:$0xff]
            %v361 = vmul.f32 %v309, %v352
            %v362 = vmul.f32 %v310, %v354
            %365 = vrot.lane.b32.xlu0 %v361, 2
            %v366 = vpop.permute.xlu0 %365
            %367 = vrot.lane.b32.xlu0 %v362, 2
            %v368 = vpop.permute.xlu0 %367
            %v371 = vsub.f32 %v359, %v366
            %v372 = vsub.f32 %v360, %v368
            %375 = vrot.lane.b32.xlu0 %v371, 127
            %v376 = vpop.permute.xlu0 %375
            %377 = vrot.lane.b32.xlu0 %v372, 127
            %v378 = vpop.permute.xlu0 %377
            %381 = vst.msk [vmem:[#allocation3] sm:$0xff] %vm300, %v376
            %382 = vst.msk [vmem:[#allocation3 + $0x8] sm:$0xff] %vm300, %v378
          $region82: #{tpu_custom_call.1} parent=73 // pred_fallthru
            _
        $region74: #{tpu_custom_call.1} parent=65 // pred_fallthru
          _
        %p383 = scmp.eq.s32.totalorder %s21, 1
        // Predicated region
        $region83: #{tpu_custom_call.1} parent=65 // pred_check
          %p384 = pneg %p383
        $region84: #{tpu_custom_call.1} parent=65 // pred_check_branch
          %386 = sbr.rel (%p384) target = $region86
        $region85: #{tpu_custom_call.1} parent=65 // pred_region
          %p387 = scmp.eq.s32.totalorder %s22, 0
          // Predicated region
          $region87: #{tpu_custom_call.1} parent=85 // pred_check
            %p388 = pneg %p387
          $region88: #{tpu_custom_call.1} parent=85 // pred_check_branch
            %390 = sbr.rel (%p388) target = $region90
          $region89: #{tpu_custom_call.1} parent=85 // pred_region
            %vm391 = vcmask 15360
            %392 = vst.msk [vmem:[#allocation2] sm:$0xff] %vm391, 0.0
            %393 = vst.msk [vmem:[#allocation2 + $0x8] sm:$0xff] %vm391, 0.0
          $region90: #{tpu_custom_call.1} parent=85 // pred_fallthru
            _
          %v394 = vld [vmem:[#allocation3] sm:$0xff]
          %v395 = vld [vmem:[#allocation3 + $0x8] sm:$0xff]
          %397 = vset.pattern.permute.xlu0 0
          %398 = vperm.xlu0 %397, %v394
          %v399 = vpop.permute.xlu0 %398
          %402 = vset.pattern.permute.xlu0 0
          %403 = vperm.xlu0 %402, %v395
          %v404 = vpop.permute.xlu0 %403
          %v406 = vmul.f32 %v399, %v266
          %v407 = vmul.f32 %v404, %v267
          %408 = vset.pattern.permute.xlu0 1
          %409 = vperm.xlu0 %408, %v394
          %v410 = vpop.permute.xlu0 %409
          %412 = vset.pattern.permute.xlu0 1
          %413 = vperm.xlu0 %412, %v395
          %v414 = vpop.permute.xlu0 %413
          %v416 = vadd.f32 %v406, %v410
          %v417 = vadd.f32 %v407, %v414
          %v418 = vmax.f32 %v416, 0.0
          %v419 = vmax.f32 %v417, 0.0
          %v420 = vld [vmem:[%s1 + $0x10] sm:$0x3]
          %v421 = vld [vmem:[%s2] sm:$0x3]
          %423 = vset.pattern.permute.xlu0 3
          %424 = vperm.xlu0 %423, %v421
          %v425 = vpop.permute.xlu0 %424
          %v428 = vsel %vm236, %v420, 0
          %430 = vmatpush.msra.mxu0 0.0
          %431 = vmatpush.msra.mxu0 0.0
          %432 = vmatpush.msra.mxu0 0.0
          %433 = vmatpush.msra.mxu0 0.0
          %434 = vmatpush.msra.mxu0 0.0
          %435 = vmatpush.msra.mxu0 0.0
          %436 = vmatpush.msra.mxu0 0.0
          %437 = vmatpush.msra.mxu0 0.0
          %438 = vmatpush.msra.mxu0 0.0
          %439 = vmatpush.msra.mxu0 0.0
          %440 = vmatpush.msra.mxu0 0.0
          %441 = vmatpush.msra.mxu0 0.0
          %442 = vmatpush.msra.mxu0 0.0
          %443 = vmatpush.msra.mxu0 0.0
          %444 = vmatpush.msra.mxu0 %v419
          %445 = vmatpush.msra.mxu0 %v418
          %446 = vmatmul.f32.gmra.mxu0 %v428
          %v447 = vpop.f32.mrf.mxu0
          %v448 = vadd.f32 %v425, %v447
          %449 = vdwg.mxu0
          %v450 = vld [vmem:[#allocation2] sm:$0x3]
          %vm451 = vcmask 1041408
          %v452 = vsel %vm451, %v448, 0.0
          %453 = vadd.xlane.f32.xlu0 %v452
          %v454 = vpop.xlane.xlu0 %453
          %v455 = vadd.f32 %v450, %v454
          %vm456 = vcmask 1024
          %457 = vst.msk [vmem:[#allocation2] sm:$0x3] %vm456, %v455
          %v458 = vld [vmem:[#allocation2] sm:$0x3]
          %v459 = vmul.f32 %v448, %v448
          %v460 = vsel %vm451, %v459, 0.0
          %461 = vadd.xlane.f32.xlu0 %v460
          %v462 = vpop.xlane.xlu0 %461
          %v463 = vadd.f32 %v458, %v462
          %vm464 = vcmask 9224
          %465 = vst.msk [vmem:[#allocation2] sm:$0x3] %vm464, %v463
          %p466 = scmp.eq.s32.totalorder %s22, 1
          // Predicated region
          $region91: #{tpu_custom_call.1} parent=85 // pred_check
            %p467 = pneg %p466
          $region92: #{tpu_custom_call.1} parent=85 // pred_check_branch
            %469 = sbr.rel (%p467) target = $region94
          $region93: #{tpu_custom_call.1} parent=85 // pred_region
            %v470 = vld [vmem:[#allocation2] sm:$0x3]
            %v471 = vmul.f32 %v470, 0.00390625
            %v472 = vmul.f32 %v471, %v471
            %474 = vrot.lane.b32.xlu0 %v472, 1
            %v475 = vpop.permute.xlu0 %474
            %v477 = vsub.f32 %v471, %v475
            %v478 = vld [vmem:[%s2] sm:$0x3]
            %v479 = vadd.f32 %v477, 1e-05
            %v480 = vrsqrt.pop %v479
            %v481 = vmul.f32 %v480, %v479
            %v482 = vmul.f32 %v481, %v480
            %v483 = vmul.f32 0.5, %v482
            %v484 = vsub.f32 1.5, %v483
            %v485 = vmul.f32 %v480, %v484
            %vm486 = vweird.f32 %v479
            %vm487 = vweird.f32 %v480
            %vm488 = vmor %vm486, %vm487
            %v489 = vsel %vm488, %v480, %v485
            %491 = vrot.lane.b32.xlu0 %v489, 3
            %v492 = vpop.permute.xlu0 %491
            %v494 = vmul.f32 %v478, %v492
            %496 = vrot.lane.b32.xlu0 %v494, 124
            %v497 = vpop.permute.xlu0 %496
            %v499 = vmul.f32 %v471, %v497
            %501 = vrot.lane.b32.xlu0 %v499, 5
            %v502 = vpop.permute.xlu0 %501
            %v504 = vsub.f32 %v478, %v502
            %v505 = vld [vmem:[%s1 + $0x10] sm:$0x3]
            %506 = vset.pattern.permute.xlu0 4
            %507 = vperm.xlu0 %506, %v494
            %v508 = vpop.permute.xlu0 %507
            %v510 = vmul.f32 %v508, %v505
            %vm511 = vcmask 123904
            %512 = vst.msk [vmem:[#allocation4] sm:$0x3] %vm511, %v510
            %v513 = vld [vmem:[%s2] sm:$0x3]
            %515 = vrot.lane.b32.xlu0 %v513, 1
            %v516 = vpop.permute.xlu0 %515
            %v518 = vmul.f32 %v494, %v516
            %520 = vrot.lane.b32.xlu0 %v504, 127
            %v521 = vpop.permute.xlu0 %520
            %v523 = vadd.f32 %v518, %v521
            %525 = vrot.lane.b32.xlu0 %v523, 12
            %v526 = vpop.permute.xlu0 %525
            %vm528 = vcmask 132224
            %529 = vst.msk [vmem:[#allocation4] sm:$0x3] %vm528, %v526
          $region94: #{tpu_custom_call.1} parent=85 // pred_fallthru
            _
        $region86: #{tpu_custom_call.1} parent=65 // pred_fallthru
          _
        %p530 = scmp.eq.s32.totalorder %s21, 2
        // Predicated region
        $region95: #{tpu_custom_call.1} parent=65 // pred_check
          %p531 = pneg %p530
        $region96: #{tpu_custom_call.1} parent=65 // pred_check_branch
          %533 = sbr.rel (%p531) target = $region98
        $region97: #{tpu_custom_call.1} parent=65 // pred_region
          %v534 = vld [vmem:[#allocation3] sm:$0xff]
          %v535 = vld [vmem:[#allocation3 + $0x8] sm:$0xff]
          %537 = vset.pattern.permute.xlu0 0
          %538 = vperm.xlu0 %537, %v534
          %v539 = vpop.permute.xlu0 %538
          %542 = vset.pattern.permute.xlu0 0
          %543 = vperm.xlu0 %542, %v535
          %v544 = vpop.permute.xlu0 %543
          %v546 = vmul.f32 %v539, %v266
          %v547 = vmul.f32 %v544, %v267
          %548 = vset.pattern.permute.xlu0 1
          %549 = vperm.xlu0 %548, %v534
          %v550 = vpop.permute.xlu0 %549
          %552 = vset.pattern.permute.xlu0 1
          %553 = vperm.xlu0 %552, %v535
          %v554 = vpop.permute.xlu0 %553
          %v556 = vadd.f32 %v546, %v550
          %v557 = vadd.f32 %v547, %v554
          %v558 = vmax.f32 %v556, 0.0
          %v559 = vmax.f32 %v557, 0.0
          %v560 = vld [vmem:[#allocation4] sm:$0x3]
          %562 = vset.pattern.permute.xlu0 16
          %563 = vperm.xlu0 %562, %v560
          %v564 = vpop.permute.xlu0 %563
          %v566 = vsel %vm236, %v560, 0
          %568 = vmatpush.msra.mxu0 0.0
          %569 = vmatpush.msra.mxu0 0.0
          %570 = vmatpush.msra.mxu0 0.0
          %571 = vmatpush.msra.mxu0 0.0
          %572 = vmatpush.msra.mxu0 0.0
          %573 = vmatpush.msra.mxu0 0.0
          %574 = vmatpush.msra.mxu0 0.0
          %575 = vmatpush.msra.mxu0 0.0
          %576 = vmatpush.msra.mxu0 0.0
          %577 = vmatpush.msra.mxu0 0.0
          %578 = vmatpush.msra.mxu0 0.0
          %579 = vmatpush.msra.mxu0 0.0
          %580 = vmatpush.msra.mxu0 0.0
          %581 = vmatpush.msra.mxu0 0.0
          %582 = vmatpush.msra.mxu0 %v559
          %583 = vmatpush.msra.mxu0 %v558
          %584 = vmatmul.f32.gmra.mxu0 %v566
          %v585 = vpop.f32.mrf.mxu0
          %v586 = vadd.f32 %v564, %v585
          %587 = vdwg.mxu0
          %v588 = vld [vmem:[%s1 + $0x12] sm:$0x3]
          %v589 = vld [vmem:[%s2] sm:$0x3]
          %591 = vset.pattern.permute.xlu0 6
          %592 = vperm.xlu0 %591, %v589
          %v593 = vpop.permute.xlu0 %592
          %vm595 = vcmask 15360
          %v597 = vsel %vm595, %v588, 0
          %vm599 = vcmask 1041408
          %v601 = vsel %vm599, %v586, 0
          %603 = vmatpush.msra.mxu0 0.0
          %604 = vmatpush.msra.mxu0 0.0
          %605 = vmatpush.msra.mxu0 0.0
          %606 = vmatpush.msra.mxu0 0.0
          %607 = vmatpush.msra.mxu0 0.0
          %608 = vmatpush.msra.mxu0 0.0
          %609 = vmatpush.msra.mxu0 0.0
          %610 = vmatpush.msra.mxu0 0.0
          %611 = vmatpush.msra.mxu0 0.0
          %612 = vmatpush.msra.mxu0 0.0
          %613 = vmatpush.msra.mxu0 0.0
          %614 = vmatpush.msra.mxu0 0.0
          %615 = vmatpush.msra.mxu0 0.0
          %616 = vmatpush.msra.mxu0 0.0
          %617 = vmatpush.msra.mxu0 0.0
          %618 = vmatpush.msra.mxu0 %v601
          %619 = vmatmul.f32.gmra.mxu0 %v597
          %v620 = vpop.f32.mrf.mxu0
          %v621 = vadd.f32 %v593, %v620
          %622 = vdwg.mxu0
          %623 = vst [vmem:[%s219] sm:$0x3] %v621
        $region98: #{tpu_custom_call.1} parent=65 // pred_fallthru
          _
        %s624 = sand.u32 %s105, 1
        %s625 = scalar_lea.sflag [#allocation7], %s624
        %s626 = sand.u32 %s105, 1
        %s627 = smul.addr %s626, 2
        %s628 = scalar_lea.vmem [#allocation6], %s627
        // Predicated region
        $region99: #{tpu_custom_call.1} parent=65 // pred_check
          %p629 = pneg %p115
        $region100: #{tpu_custom_call.1} parent=65 // pred_check_branch
          %631 = sbr.rel (%p629) target = $region102
        $region101: #{tpu_custom_call.1} parent=65 // pred_region
          %633 = vsyncadd %s625, 0
          %s634 = smul.addr %s22, 2
          %s635 = scalar_lea.hbm %s3, %s634
          %s637 = sshll.u32 %s628, 4
          %s638 = int_to_ptr.vmem [resolvable:$true] %s637
          %s639 = sshll.u32 %s635, 4
          %s640 = int_to_ptr.hbm [resolvable:$true] %s639
          %642 = dma.vmem_to_hbm [thread:$0]  %s638, 32, %s640, %s625
        $region102: #{tpu_custom_call.1} parent=65 // pred_fallthru
          _
      $region66: #{tpu_custom_call.1} parent=5 // pred_fallthru
        _
      %p643 = scmp.le.s32.totalorder 2, %s12
      // Predicated region
      $region103: #{tpu_custom_call.1} parent=5 // pred_check
        %p644 = pneg %p643
      $region104: #{tpu_custom_call.1} parent=5 // pred_check_branch
        %646 = sbr.rel (%p644) target = $region106
      $region105: #{tpu_custom_call.1} parent=5 // pred_region
        %s647 = ssub.s32 %s12, 2
        // Predicated region
        $region107: #{tpu_custom_call.1} parent=105 // pred_check
          %p648 = pneg %p121
        $region108: #{tpu_custom_call.1} parent=105 // pred_check_branch
          %650 = sbr.rel (%p648) target = $region110
        $region109: #{tpu_custom_call.1} parent=105 // pred_region
          %s651 = sand.u32 %s106, 1
          %s652 = scalar_lea.sflag [#allocation7], %s651
          %s653 = sand.u32 %s106, 1
          %s654 = smul.addr %s653, 2
          %s655 = scalar_lea.vmem [#allocation6], %s654
          %657 = dma.done %s652, 32
        $region110: #{tpu_custom_call.1} parent=105 // pred_fallthru
          _
      $region106: #{tpu_custom_call.1} parent=5 // pred_fallthru
        _
    $region6: #{tpu_custom_call.1} parent=1 // loop_footer
      %s16 = sadd.s32 1, %s12
    $region7: #{tpu_custom_call.1} parent=1 // loop_footer_branch
      %11 = sbr.rel target = $region3
    $region8: #{tpu_custom_call.1} parent=1 // loop_exit
      _
    %658 = vsyncpa [#allocation7], 1
    %s659 = scalar_lea.sflag [#allocation7], 1
    %660 = vsyncpa %s659, 1

</llo_original>
